<compile_context>
chip_gen: v7x
topology: tpu7x:2x2x1
jax: 0.10.0
libtpu: 0.0.40
codegen_flags: <defaults>
</compile_context>

<pallas_src>
import math
import jax
import jax.numpy as jnp
from jax.experimental import pallas as pl
from jax.experimental.pallas import tpu as pltpu

_INV_SQRT2 = 1.0 / math.sqrt(2.0)


def _round_up(a, b):
    return (a + b - 1) // b * b


def _cdiv(a, b):
    return (a + b - 1) // b


def _vmem_capacity_bytes():
    try:
        cap = getattr(pltpu.get_tpu_info(), "vmem_capacity_bytes", None)
        if cap:
            return int(cap)
    except Exception:
        pass
    return 64 << 20  # conservative default (v7x per-TensorCore VMEM)


def _gelu_exact(h):
    # nn.GELU() default = exact erf formulation.
    return 0.5 * h * (1.0 + jax.lax.erf(h * _INV_SQRT2))


# ---- kernel A: full-weight-resident (no H axis, no accumulator) -------------
def _mlp_kernel_resident(x_ref, w1_ref, b1_ref, w2_ref, b2_ref, o_ref):
    x = x_ref[...].astype(w1_ref.dtype)          # in-kernel cast, hidden under MXU
    h = jnp.dot(x, w1_ref[...], preferred_element_type=jnp.float32)
    h = _gelu_exact(h + b1_ref[...])             # bias + GELU in f32 on the VPU
    y = jnp.dot(h.astype(w2_ref.dtype), w2_ref[...],
                preferred_element_type=jnp.float32) + b2_ref[...]
    o_ref[...] = y.astype(o_ref.dtype)


# ---- kernel B: hidden-dim tiled (f32 accumulator, H axis = reduction) -------
def _mlp_kernel_tiled(x_ref, w1_ref, b1_ref, w2_ref, b2_ref, o_ref, acc_ref):
    kh = pl.program_id(1)

    @pl.when(kh == 0)
    def _():
        acc_ref[...] = jnp.zeros_like(acc_ref)

    x = x_ref[...].astype(w1_ref.dtype)
    h = jnp.dot(x, w1_ref[...], preferred_element_type=jnp.float32)
    h = _gelu_exact(h + b1_ref[...])
    acc_ref[...] += jnp.dot(h.astype(w2_ref.dtype), w2_ref[...],
                            preferred_element_type=jnp.float32)

    @pl.when(kh == pl.num_programs(1) - 1)
    def _():
        o_ref[...] = (acc_ref[...] + b2_ref[...]).astype(o_ref.dtype)

    # TODO(synk): dropout is a no-op at p=0.0 / eval; stochastic dropout would
    # use pltpu.prng_seed + pltpu.stateful_bernoulli if it were ever needed.


def mlp_forward(x, w1, b1, w2, b2, *, tm=512, th=None,
                compute_dtype=jnp.bfloat16):
    """ViT MLP forward.

    x: (B, N, D_in); w1: (D_in, H); b1: (H,); w2: (H, D_out); b2: (D_out,).
    Weights are the transposed PyTorch nn.Linear weights (stored (in, out)),
    so both matmuls are plain row-major MXU matmuls.
    """
    B, N, D_in = x.shape
    H = w1.shape[1]
    D_out = w2.shape[1]
    M = B * N

    out_dtype = x.dtype
    x_item = jnp.dtype(x.dtype).itemsize
    o_item = jnp.dtype(out_dtype).itemsize
    c_item = jnp.dtype(compute_dtype).itemsize

    # ---- generation-aware VMEM budget --------------------------------------
    vmem_cap = _vmem_capacity_bytes()
    vmem_limit = min(int(vmem_cap * 0.80), 112 << 20)   # ~51 MiB v7x, ~102 MiB v5e/v6e
    plan_budget = max(vmem_limit - (8 << 20), 16 << 20)  # headroom for compiler scratch

    # ---- row tile -----------------------------------------------------------
    row_align = 16
    tm = max(row_align,
             _round_up(min(int(tm), _round_up(M, row_align)), row_align))
    # megacore: keep at least two row tiles when there is enough work
    if M > 512 and _cdiv(M, tm) < 2:
        tm = _round_up(_cdiv(M, 2), row_align)

    w_bytes = (D_in * H + H * D_out) * c_item
    b_bytes = 4 * (H + D_out)

    def fits_resident(tm_):
        return (2 * tm_ * D_in * x_item + 2 * tm_ * D_out * o_item
                + 2 * w_bytes + b_bytes) <= plan_budget

    def fits_tiled(tm_, th_):
        return (2 * tm_ * D_in * x_item + 2 * tm_ * D_out * o_item
                + 2 * (D_in * th_ + th_ * D_out) * c_item
                + tm_ * D_out * 4 + b_bytes) <= plan_budget

    # ---- resident vs. H-tiled ----------------------------------------------
    resident = (th is None) and fits_resident(tm)
    if not resident:
        if th is None:
            # Largest divisor of H that is lane-aligned (multiple of 128, or H
            # itself) and fits the VMEM budget; shrink rows as a last resort.
            cands = [d for d in range(H, 0, -1)
                     if H % d == 0 and (d % 128 == 0 or d == H)]
            th = next((d for d in cands if fits_tiled(tm, d)), None)
            while th is None and tm > 64:
                tm = max(64, _round_up(tm // 2, row_align))
                if fits_resident(tm):
                    resident = True
                    break
                th = next((d for d in cands if fits_tiled(tm, d)), None)
            if not resident and th is None:
                th = cands[-1]               # smallest valid tile; best effort
        else:
            assert H % th == 0, "hidden tile must divide hidden_features"
            assert th % 128 == 0 or th == H, "hidden tile must be lane aligned"

    M_pad = _round_up(M, tm)

    # ---- wrapper-side prep: only zero-pad rows when needed (no activation
    #      cast here -- the bf16 cast happens inside the kernel) --------------
    x2d = x.reshape(M, D_in)
    if M_pad != M:
        x2d = jnp.pad(x2d, ((0, M_pad - M), (0, 0)))
    w1c = w1.astype(compute_dtype)
    w2c = w2.astype(compute_dtype)
    b1_2d = b1.reshape(1, H).astype(jnp.float32)
    b2_2d = b2.reshape(1, D_out).astype(jnp.float32)

    n_row = M_pad // tm
    io_bytes = M_pad * D_in * x_item + M_pad * D_out * o_item
    if resident:
        bytes_accessed = io_bytes + w_bytes + b_bytes
    else:
        bytes_accessed = io_bytes + n_row * (w_bytes + b_bytes)
    cost = pl.CostEstimate(
        flops=2 * M_pad * (D_in * H + H * D_out),
        transcendentals=M_pad * H,
        bytes_accessed=bytes_accessed,
    )

    if resident:
        grid_spec = pltpu.PrefetchScalarGridSpec(
            num_scalar_prefetch=0,
            grid=(n_row,),
            in_specs=[
                pl.BlockSpec((tm, D_in), lambda i: (i, 0)),    # x row tile
                pl.BlockSpec((D_in, H), lambda i: (0, 0)),     # fc1 W (resident)
                pl.BlockSpec((1, H), lambda i: (0, 0)),        # fc1 bias
                pl.BlockSpec((H, D_out), lambda i: (0, 0)),    # fc2 W (resident)
                pl.BlockSpec((1, D_out), lambda i: (0, 0)),    # fc2 bias
            ],
            out_specs=pl.BlockSpec((tm, D_out), lambda i: (i, 0)),
        )
        kernel = _mlp_kernel_resident
        dim_sem = ("parallel",)
    else:
        grid_spec = pltpu.PrefetchScalarGridSpec(
            num_scalar_prefetch=0,
            grid=(n_row, H // th),
            in_specs=[
                pl.BlockSpec((tm, D_in), lambda i, k: (i, 0)),   # x row tile
                pl.BlockSpec((D_in, th), lambda i, k: (0, k)),   # fc1 W slice
                pl.BlockSpec((1, th), lambda i, k: (0, k)),      # fc1 bias slice
                pl.BlockSpec((th, D_out), lambda i, k: (k, 0)),  # fc2 W slice
                pl.BlockSpec((1, D_out), lambda i, k: (0, 0)),   # fc2 bias
            ],
            out_specs=pl.BlockSpec((tm, D_out), lambda i, k: (i, 0)),
            scratch_shapes=[pltpu.VMEM((tm, D_out), jnp.float32)],
        )
        kernel = _mlp_kernel_tiled
        dim_sem = ("parallel", "arbitrary")

    out2d = pl.pallas_call(
        kernel,
        out_shape=jax.ShapeDtypeStruct((M_pad, D_out), out_dtype),
        grid_spec=grid_spec,
        compiler_params=pltpu.CompilerParams(
            dimension_semantics=dim_sem,
            vmem_limit_bytes=vmem_limit,
        ),
        cost_estimate=cost,
    )(x2d, w1c, b1_2d, w2c, b2_2d)

    if M_pad != M:
        out2d = out2d[:M]
    return out2d.reshape(B, N, D_out)
    # TODO(synk): tiny demo widths (D_out=32) are lane-sparse (<128) -> masked
    # partial stores; real ViT widths (768/1024) are lane-dense multiples of 128.


def _reference(x, w1, b1, w2, b2):
    h = jnp.einsum("bnd,dh->bnh", x, w1) + b1
    h = 0.5 * h * (1.0 + jax.lax.erf(h * _INV_SQRT2))
    return jnp.einsum("bnh,ho->bno", h, w2) + b2


if __name__ == "__main__":
    # Small shapes consistent with the module: B=2, tokens N=8, in=32, hidden=64
    B, N, D_in = 2, 8, 32
    H = 2 * D_in          # hidden_features
    D_out = D_in          # out_features defaults to in_features

    key = jax.random.PRNGKey(0)
    kx, kw1, kb1, kw2, kb2 = jax.random.split(key, 5)

    x = jax.random.normal(kx, (B, N, D_in), dtype=jnp.float32)
    # deterministic parameters (PyTorch Linear shapes, stored transposed)
    w1 = jax.random.normal(kw1, (D_in, H), dtype=jnp.float32) * 0.02
    b1 = jax.random.normal(kb1, (H,), dtype=jnp.float32) * 0.02
    w2 = jax.random.normal(kw2, (H, D_out), dtype=jnp.float32) * 0.02
    b2 = jax.random.normal(kb2, (D_out,), dtype=jnp.float32) * 0.02

    # 1) default path (weights fully VMEM-resident at this size)
    out = jax.block_until_ready(mlp_forward(x, w1, b1, w2, b2))
    ref = _reference(x, w1, b1, w2, b2)
    assert out.shape == (B, N, D_out)
    # bf16 matmul operands (f32 accumulation) -> relaxed tolerance vs f32 ref.
    assert jnp.allclose(out, ref, atol=5e-3, rtol=5e-2), "mismatch (resident path)"

    # 2) exercise the H-tiled accumulation path (2 hidden slices of 128)
    H2 = 256
    kw3, kb3, kw4, kb4 = jax.random.split(jax.random.PRNGKey(1), 4)
    w1b = jax.random.normal(kw3, (D_in, H2), dtype=jnp.float32) * 0.02
    b1b = jax.random.normal(kb3, (H2,), dtype=jnp.float32) * 0.02
    w2b = jax.random.normal(kw4, (H2, D_out), dtype=jnp.float32) * 0.02
    b2b = jax.random.normal(kb4, (D_out,), dtype=jnp.float32) * 0.02
    out2 = jax.block_until_ready(mlp_forward(x, w1b, b1b, w2b, b2b, th=128))
    ref2 = _reference(x, w1b, b1b, w2b, b2b)
    assert jnp.allclose(out2, ref2, atol=5e-3, rtol=5e-2), "mismatch (tiled path)"

    print("KERNEL_OK")
</pallas_src>

<mosaic_0001>
module attributes {stable_mosaic.version = 11 : i64} {
  func.func @_mlp_kernel_resident(%arg0: i32, %arg1: memref<16x32xf32, #tpu.memory_space<vmem>>, %arg2: memref<32x64xbf16, #tpu.memory_space<vmem>>, %arg3: memref<1x64xf32, #tpu.memory_space<vmem>>, %arg4: memref<64x32xbf16, #tpu.memory_space<vmem>>, %arg5: memref<1x32xf32, #tpu.memory_space<vmem>>, %arg6: memref<16x32xf32, #tpu.memory_space<vmem>>) attributes {dimension_semantics = [#tpu.dimension_semantics<parallel>], iteration_bounds = array<i64: 1>, scalar_prefetch = 0 : i64, scratch_operands = 0 : i64, tpu.core_type = #tpu.core_type<tc>, window_params = [{transform_indices = @transform_0, window_bounds = array<i64: 16, 32>}, {pipeline_mode = #tpu.pipeline_mode<synchronous>, transform_indices = @transform_1, window_bounds = array<i64: 32, 64>}, {pipeline_mode = #tpu.pipeline_mode<synchronous>, transform_indices = @transform_2, window_bounds = array<i64: 1, 64>}, {pipeline_mode = #tpu.pipeline_mode<synchronous>, transform_indices = @transform_3, window_bounds = array<i64: 64, 32>}, {pipeline_mode = #tpu.pipeline_mode<synchronous>, transform_indices = @transform_4, window_bounds = array<i64: 1, 32>}, {transform_indices = @transform_5, window_bounds = array<i64: 16, 32>}]} {
    %c0 = arith.constant 0 : index
    %c0_0 = arith.constant 0 : index
    %0 = vector.load %arg1[%c0, %c0_0] : memref<16x32xf32, #tpu.memory_space<vmem>>, vector<16x32xf32>
    %1 = arith.truncf %0 : vector<16x32xf32> to vector<16x32xbf16>
    %c0_1 = arith.constant 0 : index
    %c0_2 = arith.constant 0 : index
    %2 = vector.load %arg2[%c0_1, %c0_2] : memref<32x64xbf16, #tpu.memory_space<vmem>>, vector<32x64xbf16>
    %cst = arith.constant dense<0.000000e+00> : vector<16x64xf32>
    %3 = tpu.matmul %1, %2, %cst {dimension_numbers = #tpu.dot_dimension_numbers<[1], [0], [0], [1], [0, 0, 1, 1], [], []>} : vector<16x32xbf16>, vector<32x64xbf16>, vector<16x64xf32> -> vector<16x64xf32>
    %c0_3 = arith.constant 0 : index
    %c0_4 = arith.constant 0 : index
    %4 = vector.load %arg3[%c0_3, %c0_4] : memref<1x64xf32, #tpu.memory_space<vmem>>, vector<1x64xf32>
    %5 = vector.broadcast %4 : vector<1x64xf32> to vector<16x64xf32>
    %6 = arith.addf %3, %5 : vector<16x64xf32>
    %cst_5 = arith.constant 5.000000e-01 : f32
    %7 = vector.broadcast %cst_5 : f32 to vector<16x64xf32>
    %8 = arith.mulf %7, %6 : vector<16x64xf32>
    %cst_6 = arith.constant 0.707106769 : f32
    %9 = vector.broadcast %cst_6 : f32 to vector<16x64xf32>
    %10 = arith.mulf %6, %9 : vector<16x64xf32>
    %11 = math.erf %10 : vector<16x64xf32>
    %cst_7 = arith.constant 1.000000e+00 : f32
    %12 = vector.broadcast %cst_7 : f32 to vector<16x64xf32>
    %13 = arith.addf %12, %11 : vector<16x64xf32>
    %14 = arith.mulf %8, %13 : vector<16x64xf32>
    %15 = arith.truncf %14 : vector<16x64xf32> to vector<16x64xbf16>
    %c0_8 = arith.constant 0 : index
    %c0_9 = arith.constant 0 : index
    %16 = vector.load %arg4[%c0_8, %c0_9] : memref<64x32xbf16, #tpu.memory_space<vmem>>, vector<64x32xbf16>
    %cst_10 = arith.constant dense<0.000000e+00> : vector<16x32xf32>
    %17 = tpu.matmul %15, %16, %cst_10 {dimension_numbers = #tpu.dot_dimension_numbers<[1], [0], [0], [1], [0, 0, 1, 1], [], []>} : vector<16x64xbf16>, vector<64x32xbf16>, vector<16x32xf32> -> vector<16x32xf32>
    %c0_11 = arith.constant 0 : index
    %c0_12 = arith.constant 0 : index
    %18 = vector.load %arg5[%c0_11, %c0_12] : memref<1x32xf32, #tpu.memory_space<vmem>>, vector<1x32xf32>
    %19 = vector.broadcast %18 : vector<1x32xf32> to vector<16x32xf32>
    %20 = arith.addf %17, %19 : vector<16x32xf32>
    %c0_13 = arith.constant 0 : index
    %c0_14 = arith.constant 0 : index
    %21 = vector.load %arg6[%c0_13, %c0_14] : memref<16x32xf32, #tpu.memory_space<vmem>>, vector<16x32xf32>
    tpu.vector_store %arg6[%c0_13, %c0_14], %20 {strides = array<i32>} : memref<16x32xf32, #tpu.memory_space<vmem>>, vector<16x32xf32>,
    return
  }
  func.func @transform_0(%arg0: i32) -> (i32, i32) {
    %c0_i32 = arith.constant 0 : i32
    %c0_i32_0 = arith.constant 0 : i32
    return %arg0, %c0_i32 : i32, i32
  }
  func.func @transform_1(%arg0: i32) -> (i32, i32) {
    %c0_i32 = arith.constant 0 : i32
    %c0_i32_0 = arith.constant 0 : i32
    %c0_i32_1 = arith.constant 0 : i32
    return %c0_i32, %c0_i32_0 : i32, i32
  }
  func.func @transform_2(%arg0: i32) -> (i32, i32) {
    %c0_i32 = arith.constant 0 : i32
    %c0_i32_0 = arith.constant 0 : i32
    %c0_i32_1 = arith.constant 0 : i32
    return %c0_i32, %c0_i32_0 : i32, i32
  }
  func.func @transform_3(%arg0: i32) -> (i32, i32) {
    %c0_i32 = arith.constant 0 : i32
    %c0_i32_0 = arith.constant 0 : i32
    %c0_i32_1 = arith.constant 0 : i32
    return %c0_i32, %c0_i32_0 : i32, i32
  }
  func.func @transform_4(%arg0: i32) -> (i32, i32) {
    %c0_i32 = arith.constant 0 : i32
    %c0_i32_0 = arith.constant 0 : i32
    %c0_i32_1 = arith.constant 0 : i32
    return %c0_i32, %c0_i32_0 : i32, i32
  }
  func.func @transform_5(%arg0: i32) -> (i32, i32) {
    %c0_i32 = arith.constant 0 : i32
    %c0_i32_0 = arith.constant 0 : i32
    return %arg0, %c0_i32 : i32, i32
  }
}

</mosaic_0001>

<llo_original>
// kernel: tpu_custom_call.1
$region0: #{tpu_custom_call.1}
  #allocation0 [shape = 'u32[]', space=smem, size = 0x4, offset = 0x4, fixed_abs, tag = 'smem constant byte address 0x4 - core index']
  #allocation1 [shape = 'u32[144,128]{1,0:T(1,128)}', space=vmem, size = 0x12000, scoped, tag = 'internal scratch']
  %s0 = inlined_call_operand.vmem [shape: f32[16,32], index: 0, kind: input, shape index: {}]
  %s1 = inlined_call_operand.vmem [shape: bf16[32,64], index: 1, kind: input, shape index: {}]
  %s2 = inlined_call_operand.vmem [shape: f32[1,64], index: 2, kind: input, shape index: {}]
  %s3 = inlined_call_operand.vmem [shape: bf16[64,32], index: 3, kind: input, shape index: {}]
  %s4 = inlined_call_operand.vmem [shape: f32[1,32], index: 4, kind: input, shape index: {}]
  %s5 = inlined_call_operand.hbm [shape: f32[16,32], index: 5, kind: output, shape index: {}]
  %s6 = sld [smem:[#allocation0]]
  $region30: #{tpu_custom_call.1} parent=0
    _
  %s8 = ssub.s32 1, %s6
  %s9 = scalar_select 0, %s8, %s6
  $region1: #{tpu_custom_call.1} parent=0
    #allocation2 [shape = 'u8[8192]{0}', space=vmem, size = 0x2000, scoped, tag = 'output window, operand 0, single buffered']
    #allocation3 [shape = 's32[1]{0}', space=sflag, size = 0x4, scoped, tag = 'scoped memory for tpu_custom_call.1']
    %10 = vsyncpa [#allocation3], 0
    // Predicated region
    $region2: #{tpu_custom_call.1} parent=1 // pred_check
      _
    $region3: #{tpu_custom_call.1} parent=1 // pred_check_branch
      %12 = sbr.rel (0) target = $region5
    $region4: #{tpu_custom_call.1} parent=1 // pred_region
      _
    $region5: #{tpu_custom_call.1} parent=1 // pred_fallthru
      _
    // Predicated region
    $region6: #{tpu_custom_call.1} parent=1 // pred_check
      _
    $region7: #{tpu_custom_call.1} parent=1 // pred_check_branch
      %14 = sbr.rel (0) target = $region9
    $region8: #{tpu_custom_call.1} parent=1 // pred_region
      _
    $region9: #{tpu_custom_call.1} parent=1 // pred_fallthru
      _
    // Predicated region
    $region10: #{tpu_custom_call.1} parent=1 // pred_check
      _
    $region11: #{tpu_custom_call.1} parent=1 // pred_check_branch
      %16 = sbr.rel (0) target = $region13
    $region12: #{tpu_custom_call.1} parent=1 // pred_region
      _
    $region13: #{tpu_custom_call.1} parent=1 // pred_fallthru
      _
    // Predicated region
    $region14: #{tpu_custom_call.1} parent=1 // pred_check
      _
    $region15: #{tpu_custom_call.1} parent=1 // pred_check_branch
      %18 = sbr.rel (0) target = $region17
    $region16: #{tpu_custom_call.1} parent=1 // pred_region
      _
    $region17: #{tpu_custom_call.1} parent=1 // pred_fallthru
      _
    // Predicated region
    $region18: #{tpu_custom_call.1} parent=1 // pred_check
      _
    $region19: #{tpu_custom_call.1} parent=1 // pred_check_branch
      %20 = sbr.rel (0) target = $region21
    $region20: #{tpu_custom_call.1} parent=1 // pred_region
      _
    $region21: #{tpu_custom_call.1} parent=1 // pred_fallthru
      _
    %v22 = vld [vmem:[%s0] sm:$0xff]
    %v23 = vld [vmem:[%s0 + $0x8] sm:$0xff]
    %v24 = vpack.c.bf16 %v23, %v22
    %v25 = vld [vmem:[%s1] sm:$0xf]
    %v26 = vld [vmem:[%s1 + $0x4] sm:$0xf]
    %v27 = vld [vmem:[%s1 + $0x8] sm:$0xf]
    %v28 = vld [vmem:[%s1 + $0xc] sm:$0xf]
    %v29 = vld [vmem:[%s2] sm:$0x1]
    %v31 = vlaneseq
    %v32 = vshrl.u32 %v31, 7
    %v33 = vsub.s32 0, %v32
    %v34 = vrot.slane %v29, %v33
    %v40 = vunpack.c.l.b16 %v25
    %v41 = vunpack.c.l.b16 %v26
    %v42 = vunpack.c.l.b16 %v27
    %v43 = vunpack.c.l.b16 %v28
    %v44 = vpack.c.b16 %v41, %v40
    %v45 = vpack.c.b16 %v43, %v42
    %vm48 = vcmask 261120
    %v50 = vsel %vm48, %v24, 0
    %52 = vmatprep.subr.bf16.mxu0 0
    %53 = vmatpush1.bf16.msra.mxu0 %v44
    %54 = vmatprep.subr.bf16.mxu0 0
    %55 = vmatpush1.bf16.msra.mxu0 %v45
    %56 = vmatprep.subr.bf16.mxu0 0
    %57 = vmatpush1.bf16.msra.mxu0 0
    %58 = vmatprep.subr.bf16.mxu0 0
    %59 = vmatpush1.bf16.msra.mxu0 0
    %60 = vmatprep.subr.bf16.mxu0 0
    %61 = vmatpush1.bf16.msra.mxu0 0
    %62 = vmatprep.subr.bf16.mxu0 0
    %63 = vmatpush1.bf16.msra.mxu0 0
    %64 = vmatprep.subr.bf16.mxu0 0
    %65 = vmatpush1.bf16.msra.mxu0 0
    %66 = vmatprep.subr.bf16.mxu0 0
    %67 = vmatpush1.bf16.msra.mxu0 0
    %68 = vmatprep.subr.bf16.mxu0 0
    %69 = vmatpush1.bf16.msra.mxu0 0
    %70 = vmatprep.subr.bf16.mxu0 0
    %71 = vmatpush1.bf16.msra.mxu0 0
    %72 = vmatprep.subr.bf16.mxu0 0
    %73 = vmatpush1.bf16.msra.mxu0 0
    %74 = vmatprep.subr.bf16.mxu0 0
    %75 = vmatpush1.bf16.msra.mxu0 0
    %76 = vmatprep.subr.bf16.mxu0 0
    %77 = vmatpush1.bf16.msra.mxu0 0
    %78 = vmatprep.subr.bf16.mxu0 0
    %79 = vmatpush1.bf16.msra.mxu0 0
    %80 = vmatprep.subr.bf16.mxu0 0
    %81 = vmatpush1.bf16.msra.mxu0 0
    %82 = vmatprep.subr.bf16.mxu0 0
    %83 = vmatpush1.bf16.msra.mxu0 0
    %84 = vmatprep.mubr.bf16.mxu0 0
    %85 = vmatmul.mubr.bf16.gmra.mrb[0].mxu0 %v50
    %v86 = vpop.f32.mrb[0].mxu0
    %v87 = vadd.f32 %v34, %v86
    %v88 = vpop.f32.mrb[0].mxu0
    %v89 = vpop.f32.mrb[0].mxu0
    %v90 = vadd.f32 %v34, %v89
    %v91 = vpop.f32.mrb[0].mxu0
    %92 = vdwg.mxu0
    %v93 = vmul.f32 %v87, 0.5
    %v94 = vmul.f32 %v90, 0.5
    %v95 = vmul.f32 %v87, 0.70710677
    %v96 = vmul.f32 %v90, 0.70710677
    %v97 = verf.f32.pop %v95
    %v98 = verf.f32.pop %v96
    %v99 = vadd.f32 %v97, 1.0
    %v100 = vadd.f32 %v98, 1.0
    %v101 = vmul.f32 %v93, %v99
    %v102 = vmul.f32 %v94, %v100
    %v103 = vpack.c.bf16 %v102, %v101
    %v104 = vld [vmem:[%s3] sm:$0xf]
    %v105 = vld [vmem:[%s3 + $0x4] sm:$0xf]
    %v106 = vld [vmem:[%s3 + $0x8] sm:$0xf]
    %v107 = vld [vmem:[%s3 + $0xc] sm:$0xf]
    %v108 = vld [vmem:[%s3 + $0x10] sm:$0xf]
    %v109 = vld [vmem:[%s3 + $0x14] sm:$0xf]
    %v110 = vld [vmem:[%s3 + $0x18] sm:$0xf]
    %v111 = vld [vmem:[%s3 + $0x1c] sm:$0xf]
    %v112 = vld [vmem:[%s4] sm:$0x1]
    %v114 = vlaneseq
    %v115 = vshrl.u32 %v114, 7
    %v116 = vsub.s32 0, %v115
    %v117 = vrot.slane %v112, %v116
    %v127 = vunpack.c.l.b16 %v104
    %v128 = vunpack.c.l.b16 %v105
    %v129 = vunpack.c.l.b16 %v106
    %v130 = vunpack.c.l.b16 %v107
    %v131 = vunpack.c.l.b16 %v108
    %v132 = vunpack.c.l.b16 %v109
    %v133 = vunpack.c.l.b16 %v110
    %v134 = vunpack.c.l.b16 %v111
    %v135 = vpack.c.b16 %v128, %v127
    %v136 = vpack.c.b16 %v130, %v129
    %v137 = vpack.c.b16 %v132, %v131
    %v138 = vpack.c.b16 %v134, %v133
    %vm143 = vcmask 523264
    %v145 = vsel %vm143, %v103, 0
    %147 = vmatprep.subr.bf16.mxu0 0
    %148 = vmatpush1.bf16.msra.mxu0 %v135
    %149 = vmatprep.subr.bf16.mxu0 0
    %150 = vmatpush1.bf16.msra.mxu0 %v136
    %151 = vmatprep.subr.bf16.mxu0 0
    %152 = vmatpush1.bf16.msra.mxu0 %v137
    %153 = vmatprep.subr.bf16.mxu0 0
    %154 = vmatpush1.bf16.msra.mxu0 %v138
    %155 = vmatprep.subr.bf16.mxu0 0
    %156 = vmatpush1.bf16.msra.mxu0 0
    %157 = vmatprep.subr.bf16.mxu0 0
    %158 = vmatpush1.bf16.msra.mxu0 0
    %159 = vmatprep.subr.bf16.mxu0 0
    %160 = vmatpush1.bf16.msra.mxu0 0
    %161 = vmatprep.subr.bf16.mxu0 0
    %162 = vmatpush1.bf16.msra.mxu0 0
    %163 = vmatprep.subr.bf16.mxu0 0
    %164 = vmatpush1.bf16.msra.mxu0 0
    %165 = vmatprep.subr.bf16.mxu0 0
    %166 = vmatpush1.bf16.msra.mxu0 0
    %167 = vmatprep.subr.bf16.mxu0 0
    %168 = vmatpush1.bf16.msra.mxu0 0
    %169 = vmatprep.subr.bf16.mxu0 0
    %170 = vmatpush1.bf16.msra.mxu0 0
    %171 = vmatprep.subr.bf16.mxu0 0
    %172 = vmatpush1.bf16.msra.mxu0 0
    %173 = vmatprep.subr.bf16.mxu0 0
    %174 = vmatpush1.bf16.msra.mxu0 0
    %175 = vmatprep.subr.bf16.mxu0 0
    %176 = vmatpush1.bf16.msra.mxu0 0
    %177 = vmatprep.subr.bf16.mxu0 0
    %178 = vmatpush1.bf16.msra.mxu0 0
    %179 = vmatprep.mubr.bf16.mxu0 0
    %180 = vmatmul.mubr.bf16.gmra.mrb[0].mxu0 %v145
    %v181 = vpop.f32.mrb[0].mxu0
    %v182 = vadd.f32 %v117, %v181
    %v183 = vpop.f32.mrb[0].mxu0
    %v184 = vpop.f32.mrb[0].mxu0
    %v185 = vadd.f32 %v117, %v184
    %v186 = vpop.f32.mrb[0].mxu0
    %187 = vdwg.mxu0
    %188 = vst.msk [vmem:[#allocation2] sm:$0xff] %vm48, %v182
    %189 = vst.msk [vmem:[#allocation2 + $0x8] sm:$0xff] %vm48, %v185
    // Predicated region
    $region22: #{tpu_custom_call.1} parent=1 // pred_check
      _
    $region23: #{tpu_custom_call.1} parent=1 // pred_check_branch
      %191 = sbr.rel (0) target = $region25
    $region24: #{tpu_custom_call.1} parent=1 // pred_region
      %s193 = ssub.s32 256, 256
      %194 = vsyncadd [#allocation3], %s193
      %s195 = sshll.u32 [#allocation2], 4
      %s196 = int_to_ptr.vmem [resolvable:$true] %s195
      %201 = dma.vmem_to_hbm [thread:$0]  %s196, 256, %s5, [#allocation3], 128, 128, 8
    $region25: #{tpu_custom_call.1} parent=1 // pred_fallthru
      _
    // Predicated region
    $region26: #{tpu_custom_call.1} parent=1 // pred_check
      _
    $region27: #{tpu_custom_call.1} parent=1 // pred_check_branch
      %203 = sbr.rel (0) target = $region29
    $region28: #{tpu_custom_call.1} parent=1 // pred_region
      %204 = dma.done [#allocation3], 256
    $region29: #{tpu_custom_call.1} parent=1 // pred_fallthru
      _
    %205 = vsyncpa [#allocation3], 1

</llo_original>
